<compile_context>
chip_gen: v6e
topology: v6e:2x2x1
jax: 0.10.0
libtpu: 0.0.40
codegen_flags: <defaults>
</compile_context>

<pallas_src>
import functools

import jax
import jax.numpy as jnp
from jax.experimental import pallas as pl
from jax.experimental.pallas import tpu as pltpu


# ---------------------------------------------------------------------------
# Kernels
# ---------------------------------------------------------------------------
def _fused_kernel(x_ref, w_ref, b_ref, o_ref, *, scaling_factor):
    # x_ref: (tm, K), w_ref: (K, tn), b_ref: (1, tn) -> o_ref: (tm, tn)
    z = jnp.dot(x_ref[...], w_ref[...], preferred_element_type=jnp.float32)
    z = z + b_ref[...].astype(jnp.float32)           # (1, tn) broadcasts over rows
    sig = 1.0 / (1.0 + jnp.exp(-z))                  # exact sigmoid (EUP slack)
    o_ref[...] = (z * sig * scaling_factor).astype(o_ref.dtype)


def _reduction_kernel(x_ref, w_ref, b_ref, o_ref, acc_ref, *, scaling_factor):
    # grid = (M//tm, N//tn, K//tk); K is the reduction ("arbitrary") axis.
    @pl.when(pl.program_id(2) == 0)
    def _():
        acc_ref[...] = jnp.zeros_like(acc_ref)

    acc_ref[...] += jnp.dot(x_ref[...], w_ref[...],
                            preferred_element_type=jnp.float32)

    @pl.when(pl.program_id(2) == pl.num_programs(2) - 1)
    def _():
        z = acc_ref[...] + b_ref[...].astype(jnp.float32)
        sig = 1.0 / (1.0 + jnp.exp(-z))
        o_ref[...] = (z * sig * scaling_factor).astype(o_ref.dtype)


# ---------------------------------------------------------------------------
# Tile / VMEM helpers
# ---------------------------------------------------------------------------
def _round_up(v, m):
    return -(-v // m) * m


def _pick_tile(dim, desired, align):
    """Largest tile <= desired that is a multiple of `align` and divides `dim`
    (or the full dim if dim is small).  `dim` is always pre-padded to a
    multiple of `align`, so the result is always (8,128)-friendly."""
    if dim <= desired:
        return dim
    t = (desired // align) * align
    while t >= align:
        if dim % t == 0:
            return t
        t -= align
    return dim


def _vmem_capacity_bytes():
    try:
        return int(pltpu.get_tpu_info().vmem_capacity_bytes)
    except Exception:
        return 128 * 1024 * 1024  # v5e/v6e-sized fallback


# ---------------------------------------------------------------------------
# Wrapper
# ---------------------------------------------------------------------------
def linear_swish_scale(
    x,
    weight,
    bias,
    scaling_factor,
    *,
    tm=256,
    tn=512,
    tk=None,
    compute_dtype=None,
    vmem_limit_bytes=None,
):
    """x: [M, K], weight: [N, K] (nn.Linear layout), bias: [N] -> [M, N]."""
    M, K = x.shape
    N, K2 = weight.shape
    assert K == K2 and bias.shape == (N,)
    out_dtype = x.dtype
    scale = float(scaling_factor)

    # --- generation-aware VMEM budget ------------------------------------
    cap = _vmem_capacity_bytes()
    if vmem_limit_bytes is None:
        # ~0.5x physical capacity: 32 MiB on v7x (64 MiB VMEM), 64 MiB on v5e/v6e.
        vmem_limit_bytes = min(64 * 1024 * 1024, max(32 * 1024 * 1024, cap // 2))
    if tk is None:
        tk = 4096 if cap >= 100 * 1024 * 1024 else 2048  # exploit v5e/v6e's 128 MiB

    # --- wrapper-side padding so every block is (8,128)-aligned ----------
    Mp, Np, Kp = _round_up(M, 8), _round_up(N, 128), _round_up(K, 128)
    if (Mp, Kp) != (M, K):
        x = jnp.pad(x, ((0, Mp - M), (0, Kp - K)))
    # Pre-transpose weight to [K, N] once (parameter-setup cost, amortized across
    # calls) so the kernel contracts a standard (tm,tk)x(tk,tn) — no per-tile XLU
    # transpose of the weight tile.
    w_kn = jnp.transpose(weight)
    if (Kp, Np) != (K, N):
        w_kn = jnp.pad(w_kn, ((0, Kp - K), (0, Np - N)))
    b2 = bias.reshape(1, N)
    if Np != N:
        b2 = jnp.pad(b2, ((0, 0), (0, Np - N)))

    # Optional bf16 inputs (f32 accumulation stays): native MXU rate + halved
    # HBM traffic on v6e/v7x (v7x MXU is bf16/fp8 only — bf16 is the target).
    if compute_dtype is not None:
        x = x.astype(compute_dtype)
        w_kn = w_kn.astype(compute_dtype)

    # --- tile selection ----------------------------------------------------
    tm = _pick_tile(Mp, tm, 8)      # sublane-aligned
    tn = _pick_tile(Np, tn, 128)    # lane-dense output stores
    tk = _pick_tile(Kp, tk, 128)

    # Guarantee a parallel grid extent >= 4 so megacore sharding (v7x: 2 TCs)
    # and BlockSpec double-buffering have work to overlap, even for small M/N.
    while (Mp // tm) * (Np // tn) < 4:
        if tn > 128:
            new_tn = _pick_tile(Np, max(128, tn // 2), 128)
            if new_tn < tn:
                tn = new_tn
                continue
        if tm > 8:
            new_tm = _pick_tile(Mp, max(8, tm // 2), 8)
            if new_tm < tm:
                tm = new_tm
                continue
        break

    # Keep the double-buffered working set inside the scoped VMEM budget.
    in_item = jnp.dtype(x.dtype).itemsize
    w_item = jnp.dtype(w_kn.dtype).itemsize
    out_item = jnp.dtype(out_dtype).itemsize

    def working_set(tm_, tn_, tk_):
        dbuf_in = 2 * (tm_ * tk_ * in_item + tk_ * tn_ * w_item + tn_ * 4)  # x, W, bias
        dbuf_out = 2 * tm_ * tn_ * out_item
        acc = tm_ * tn_ * 4
        return dbuf_in + dbuf_out + acc

    budget = int(0.6 * vmem_limit_bytes)
    while working_set(tm, tn, tk) > budget:
        if tk > 1024:                                     # prefer keeping tk >= 1024
            nk = _pick_tile(Kp, max(1024, tk // 2), 128)
            if nk < tk:
                tk = nk
                continue
        if tn > 128:
            nn_ = _pick_tile(Np, max(128, tn // 2), 128)
            if nn_ < tn:
                tn = nn_
                continue
        if tm > 8:
            nm = _pick_tile(Mp, max(8, tm // 2), 8)
            if nm < tm:
                tm = nm
                continue
        if tk > 128:
            nk = _pick_tile(Kp, max(128, tk // 2), 128)
            if nk < tk:
                tk = nk
                continue
        break

    # --- grid / specs -------------------------------------------------------
    if tk == Kp:
        # Single pass over K: no reduction axis, no accumulator scratch; each
        # output tile is computed and written exactly once with bias+SiLU fused.
        kernel = functools.partial(_fused_kernel, scaling_factor=scale)
        grid = (Mp // tm, Np // tn)
        in_specs = [
            pl.BlockSpec((tm, Kp), lambda i, j: (i, 0)),   # x tile
            pl.BlockSpec((Kp, tn), lambda i, j: (0, j)),   # weight tile, [K, N] layout
            pl.BlockSpec((1, tn), lambda i, j: (0, j)),    # bias tile
        ]
        out_specs = pl.BlockSpec((tm, tn), lambda i, j: (i, j))
        scratch_shapes = []
        dim_sem = ("parallel", "parallel")
    else:
        kernel = functools.partial(_reduction_kernel, scaling_factor=scale)
        grid = (Mp // tm, Np // tn, Kp // tk)
        in_specs = [
            pl.BlockSpec((tm, tk), lambda i, j, k: (i, k)),
            pl.BlockSpec((tk, tn), lambda i, j, k: (k, j)),
            pl.BlockSpec((1, tn), lambda i, j, k: (0, j)),
        ]
        out_specs = pl.BlockSpec((tm, tn), lambda i, j, k: (i, j))
        scratch_shapes = [pltpu.VMEM((tm, tn), jnp.float32)]
        dim_sem = ("parallel", "parallel", "arbitrary")

    out = pl.pallas_call(
        kernel,
        out_shape=jax.ShapeDtypeStruct((Mp, Np), out_dtype),
        grid_spec=pltpu.PrefetchScalarGridSpec(
            num_scalar_prefetch=0,
            grid=grid,
            in_specs=in_specs,
            out_specs=out_specs,
            scratch_shapes=scratch_shapes,
        ),
        compiler_params=pltpu.CompilerParams(
            dimension_semantics=dim_sem,
            vmem_limit_bytes=vmem_limit_bytes,
        ),
    )(x, w_kn, b2)

    if (Mp, Np) != (M, N):
        out = out[:M, :N]
    return out


def _reference(x, weight, bias, scaling_factor):
    z = x @ weight.T + bias
    return z * jax.nn.sigmoid(z) * scaling_factor


if __name__ == "__main__":
    key = jax.random.PRNGKey(0)
    kx, kw, kb = jax.random.split(key, 3)

    # Small shapes consistent with the module ([M,K]->[M,N] linear + swish*scale).
    batch, in_features, out_features = 64, 256, 128
    scaling_factor = 2.0

    # nn.Linear-style init: U(-1/sqrt(in), 1/sqrt(in)).
    bound = 1.0 / (in_features ** 0.5)
    x = jax.random.normal(kx, (batch, in_features), dtype=jnp.float32)
    weight = jax.random.uniform(
        kw, (out_features, in_features), jnp.float32, -bound, bound
    )
    bias = jax.random.uniform(kb, (out_features,), jnp.float32, -bound, bound)

    ref = _reference(x, weight, bias, scaling_factor)

    # Default path: tk == K -> fully fused single-pass kernel (exact sigmoid).
    out = jax.block_until_ready(linear_swish_scale(x, weight, bias, scaling_factor))
    assert out.shape == (batch, out_features)
    assert jnp.allclose(out, ref, atol=1e-4, rtol=1e-4), "mismatch (fused path)"

    # K-reduction path (forced smaller tk).
    out_r = jax.block_until_ready(
        linear_swish_scale(x, weight, bias, scaling_factor, tk=128)
    )
    assert jnp.allclose(out_r, ref, atol=1e-4, rtol=1e-4), "mismatch (reduction path)"

    # Non-(8,128)-aligned shapes -> wrapper-side padding keeps lane-dense stores.
    m2, k2, n2 = 37, 200, 120
    x2 = jax.random.normal(kx, (m2, k2), dtype=jnp.float32)
    w2 = jax.random.uniform(kw, (n2, k2), jnp.float32, -bound, bound)
    b2_ = jax.random.uniform(kb, (n2,), jnp.float32, -bound, bound)
    ref2 = _reference(x2, w2, b2_, scaling_factor)
    out2 = jax.block_until_ready(linear_swish_scale(x2, w2, b2_, scaling_factor))
    assert out2.shape == (m2, n2)
    assert jnp.allclose(out2, ref2, atol=1e-4, rtol=1e-4), "mismatch (padded path)"

    # Optional bf16-compute path (f32 accumulation, f32 output) — perf option
    # recommended for v6e/v7x; looser tolerance since input dtype changes.
    out_bf = jax.block_until_ready(
        linear_swish_scale(x, weight, bias, scaling_factor,
                           compute_dtype=jnp.bfloat16)
    )
    assert jnp.allclose(out_bf, ref, atol=5e-2, rtol=5e-2), "mismatch (bf16 path)"

    print("KERNEL_OK")
</pallas_src>

<mosaic_0001>
module attributes {stable_mosaic.version = 11 : i64} {
  func.func @_fused_kernel(%arg0: i32, %arg1: i32, %arg2: memref<16x256xf32, #tpu.memory_space<vmem>>, %arg3: memref<256x128xf32, #tpu.memory_space<vmem>>, %arg4: memref<1x128xf32, #tpu.memory_space<vmem>>, %arg5: memref<16x128xf32, #tpu.memory_space<vmem>>) attributes {dimension_semantics = [#tpu.dimension_semantics<parallel>, #tpu.dimension_semantics<parallel>], iteration_bounds = array<i64: 4, 1>, scalar_prefetch = 0 : i64, scratch_operands = 0 : i64, tpu.core_type = #tpu.core_type<tc>, window_params = [{transform_indices = @transform_0, window_bounds = array<i64: 16, 256>}, {transform_indices = @transform_1, window_bounds = array<i64: 256, 128>}, {transform_indices = @transform_2, window_bounds = array<i64: 1, 128>}, {transform_indices = @transform_3, window_bounds = array<i64: 16, 128>}]} {
    %c0 = arith.constant 0 : index
    %c0_0 = arith.constant 0 : index
    %0 = vector.load %arg2[%c0, %c0_0] : memref<16x256xf32, #tpu.memory_space<vmem>>, vector<16x256xf32>
    %c0_1 = arith.constant 0 : index
    %c0_2 = arith.constant 0 : index
    %1 = vector.load %arg3[%c0_1, %c0_2] : memref<256x128xf32, #tpu.memory_space<vmem>>, vector<256x128xf32>
    %cst = arith.constant dense<0.000000e+00> : vector<16x128xf32>
    %2 = tpu.matmul %0, %1, %cst {dimension_numbers = #tpu.dot_dimension_numbers<[1], [0], [0], [1], [0, 0, 1, 1], [], []>} : vector<16x256xf32>, vector<256x128xf32>, vector<16x128xf32> -> vector<16x128xf32>
    %c0_3 = arith.constant 0 : index
    %c0_4 = arith.constant 0 : index
    %3 = vector.load %arg4[%c0_3, %c0_4] : memref<1x128xf32, #tpu.memory_space<vmem>>, vector<1x128xf32>
    %4 = vector.broadcast %3 : vector<1x128xf32> to vector<16x128xf32>
    %5 = arith.addf %2, %4 : vector<16x128xf32>
    %cst_5 = arith.constant 0.000000e+00 : f32
    %6 = vector.broadcast %cst_5 : f32 to vector<16x128xf32>
    %7 = arith.subf %6, %5 : vector<16x128xf32>
    %8 = math.exp %7 : vector<16x128xf32>
    %cst_6 = arith.constant 1.000000e+00 : f32
    %9 = vector.broadcast %cst_6 : f32 to vector<16x128xf32>
    %10 = arith.addf %9, %8 : vector<16x128xf32>
    %cst_7 = arith.constant 1.000000e+00 : f32
    %11 = vector.broadcast %cst_7 : f32 to vector<16x128xf32>
    %12 = arith.divf %11, %10 : vector<16x128xf32>
    %13 = arith.mulf %5, %12 : vector<16x128xf32>
    %cst_8 = arith.constant 2.000000e+00 : f32
    %14 = vector.broadcast %cst_8 : f32 to vector<16x128xf32>
    %15 = arith.mulf %13, %14 : vector<16x128xf32>
    %c0_9 = arith.constant 0 : index
    %c0_10 = arith.constant 0 : index
    %16 = vector.load %arg5[%c0_9, %c0_10] : memref<16x128xf32, #tpu.memory_space<vmem>>, vector<16x128xf32>
    tpu.vector_store %arg5[%c0_9, %c0_10], %15 {strides = array<i32>} : memref<16x128xf32, #tpu.memory_space<vmem>>, vector<16x128xf32>,
    return
  }
  func.func @transform_0(%arg0: i32, %arg1: i32) -> (i32, i32) {
    %c0_i32 = arith.constant 0 : i32
    %c0_i32_0 = arith.constant 0 : i32
    return %arg0, %c0_i32 : i32, i32
  }
  func.func @transform_1(%arg0: i32, %arg1: i32) -> (i32, i32) {
    %c0_i32 = arith.constant 0 : i32
    %c0_i32_0 = arith.constant 0 : i32
    return %c0_i32, %arg1 : i32, i32
  }
  func.func @transform_2(%arg0: i32, %arg1: i32) -> (i32, i32) {
    %c0_i32 = arith.constant 0 : i32
    %c0_i32_0 = arith.constant 0 : i32
    return %c0_i32, %arg1 : i32, i32
  }
  func.func @transform_3(%arg0: i32, %arg1: i32) -> (i32, i32) {
    %c0_i32 = arith.constant 0 : i32
    return %arg0, %arg1 : i32, i32
  }
}

</mosaic_0001>

<llo_original>
// kernel: tpu_custom_call.1
$region0: #{tpu_custom_call.1}
  #allocation0 [shape = 'u32[]', space=smem, size = 0x4, offset = 0x4, fixed_abs, tag = 'smem constant byte address 0x4 - core index']
  #allocation1 [shape = 'u32[144,128]{1,0:T(1,128)}', space=vmem, size = 0x12000, scoped, tag = 'internal scratch']
  %s0 = inlined_call_operand.hbm [shape: f32[64,256], index: 0, kind: input, shape index: {}]
  %s1 = inlined_call_operand.hbm [shape: f32[256,128], index: 1, kind: input, shape index: {}]
  %s2 = inlined_call_operand.vmem [shape: f32[1,128], index: 2, kind: input, shape index: {}]
  %s3 = inlined_call_operand.hbm [shape: f32[64,128], index: 3, kind: output, shape index: {}]
  %s4 = sld [smem:[#allocation0]]
  $region53: #{tpu_custom_call.1} parent=0
    _
  %s6 = ssub.s32 1, %s4
  %s7 = scalar_select 0, %s6, %s4
  $region1: #{tpu_custom_call.1} parent=0
    #allocation2 [shape = 'u8[32768]{0}', space=vmem, size = 0x8000, scoped, tag = 'input window, operand 0']
    #allocation3 [shape = 's32[2]{0}', space=sflag, size = 0x8, scoped, tag = 'scoped memory for tpu_custom_call.1']
    #allocation4 [shape = 's32[2]{0}', space=sflag, size = 0x8, scoped, tag = 'scoped memory for tpu_custom_call.1']
    #allocation5 [shape = 'u8[131072]{0}', space=vmem, size = 0x20000, scoped, tag = 'input window, operand 1, single buffered']
    #allocation6 [shape = 's32[1]{0}', space=sflag, size = 0x4, scoped, tag = 'scoped memory for tpu_custom_call.1']
    #allocation7 [shape = 'u8[16384]{0}', space=vmem, size = 0x4000, scoped, tag = 'output window, operand 0']
    %8 = vsyncpa [#allocation3], 0
    %s9 = scalar_lea.sflag [#allocation3], 1
    %10 = vsyncpa %s9, 0
    %11 = vsyncpa [#allocation6], 0
    %12 = vsyncpa [#allocation4], 0
    %s13 = scalar_lea.sflag [#allocation4], 1
    %14 = vsyncpa %s13, 0
    loop: start=0, step=1, limit=6
    $region2: #{tpu_custom_call.1} parent=1 // loop_pre_header
      _
    $region3: #{tpu_custom_call.1} parent=1 // loop_header
      %s16 = sphi 0, %s20
      %p17 = scmp.ge.s32.totalorder %s16, 6
      %s23 = sphi 0, %s35
      %s24 = sphi 0, %s31
      %s25 = sphi 0, %s23
      %s26 = sphi 0, %s24
      %s27 = sphi 0, %s25
      %s28 = sphi 0, %s26
      %s38 = sphi 0, %s40
      %s41 = sphi 0, %s38
      %s42 = sphi 0, %s41
      %s58 = sphi 0, %s42
      %s64 = sphi 0, %s66
      %s67 = sphi 0, %s64
      %s68 = sphi 0, %s67
      %s84 = sphi 0, %s68
      %s90 = sphi 0, %s92
      %s93 = sphi 0, %s90
      %s94 = sphi 0, %s93
      %s110 = sphi 0, %s94
      %s118 = sphi 0, %s120
      %s121 = sphi 0, %s118
      %s122 = sphi 0, %s121
      %s138 = sphi 0, %s122
    $region4: #{tpu_custom_call.1} parent=1 // loop_header_branch
      %19 = sbr.rel (%p17) target = $region8
    $region5: #{tpu_custom_call.1} parent=1 // loop_body
      %s21 = ssub.s32 %s16, 1
      %s22 = ssub.s32 %s16, 2
      %s29 = sadd.s32 1, %s24
      %p30 = scmp.ge.s32.totalorder %s29, 1
      %s31 = scalar_select %p30, 0, %s29
      %s32 = sadd.s32 1, %s23
      %s33 = scalar_select %p30, %s32, %s23
      %p34 = scmp.ge.s32.totalorder %s33, 4
      %s35 = scalar_select %p34, 0, %s33
      %s36 = ssub.s32 %s23, %s35
      %p37 = scmp.eq.s32.totalorder %s36, 0
      %s39 = sadd.s32 %s38, 1
      %s40 = scalar_select %p37, %s38, %s39
      %p43 = pneg %p37
      %p44 = scmp.eq.s32.totalorder %s16, 3
      %p45 = por %p43, %p44
      %p46 = scmp.ne.s32.totalorder %s38, %s41
      %p47 = scmp.eq.s32.totalorder %s16, 0
      %p48 = por %p46, %p47
      %p49 = scmp.ne.s32.totalorder %s38, %s41
      %p50 = scmp.eq.s32.totalorder %s21, 3
      %p51 = por %p49, %p50
      %p52 = scmp.ne.s32.totalorder %s41, %s42
      %p53 = scmp.eq.s32.totalorder %s21, 0
      %p54 = por %p52, %p53
      %p55 = scmp.ne.s32.totalorder %s41, %s42
      %p56 = scmp.eq.s32.totalorder %s22, 3
      %p57 = por %p55, %p56
      %p59 = scmp.ne.s32.totalorder %s42, %s58
      %p60 = scmp.eq.s32.totalorder %s22, 0
      %p61 = por %p59, %p60
      %s62 = ssub.s32 %s24, %s31
      %p63 = scmp.eq.s32.totalorder %s62, 0
      %s65 = sadd.s32 %s64, 1
      %s66 = scalar_select %p63, %s64, %s65
      %p69 = pneg %p63
      %p70 = scmp.eq.s32.totalorder %s16, 3
      %p71 = por %p69, %p70
      %p72 = scmp.ne.s32.totalorder %s64, %s67
      %p73 = scmp.eq.s32.totalorder %s16, 0
      %p74 = por %p72, %p73
      %p75 = scmp.ne.s32.totalorder %s64, %s67
      %p76 = scmp.eq.s32.totalorder %s21, 3
      %p77 = por %p75, %p76
      %p78 = scmp.ne.s32.totalorder %s67, %s68
      %p79 = scmp.eq.s32.totalorder %s21, 0
      %p80 = por %p78, %p79
      %p81 = scmp.ne.s32.totalorder %s67, %s68
      %p82 = scmp.eq.s32.totalorder %s22, 3
      %p83 = por %p81, %p82
      %p85 = scmp.ne.s32.totalorder %s68, %s84
      %p86 = scmp.eq.s32.totalorder %s22, 0
      %p87 = por %p85, %p86
      %s88 = ssub.s32 %s24, %s31
      %p89 = scmp.eq.s32.totalorder %s88, 0
      %s91 = sadd.s32 %s90, 1
      %s92 = scalar_select %p89, %s90, %s91
      %p95 = pneg %p89
      %p96 = scmp.eq.s32.totalorder %s16, 3
      %p97 = por %p95, %p96
      %p98 = scmp.ne.s32.totalorder %s90, %s93
      %p99 = scmp.eq.s32.totalorder %s16, 0
      %p100 = por %p98, %p99
      %p101 = scmp.ne.s32.totalorder %s90, %s93
      %p102 = scmp.eq.s32.totalorder %s21, 3
      %p103 = por %p101, %p102
      %p104 = scmp.ne.s32.totalorder %s93, %s94
      %p105 = scmp.eq.s32.totalorder %s21, 0
      %p106 = por %p104, %p105
      %p107 = scmp.ne.s32.totalorder %s93, %s94
      %p108 = scmp.eq.s32.totalorder %s22, 3
      %p109 = por %p107, %p108
      %p111 = scmp.ne.s32.totalorder %s94, %s110
      %p112 = scmp.eq.s32.totalorder %s22, 0
      %p113 = por %p111, %p112
      %s114 = ssub.s32 %s23, %s35
      %s115 = ssub.s32 %s24, %s31
      %s116 = sor.u32 %s114, %s115
      %p117 = scmp.eq.s32.totalorder %s116, 0
      %s119 = sadd.s32 %s118, 1
      %s120 = scalar_select %p117, %s118, %s119
      %p123 = pneg %p117
      %p124 = scmp.eq.s32.totalorder %s16, 3
      %p125 = por %p123, %p124
      %p126 = scmp.ne.s32.totalorder %s118, %s121
      %p127 = scmp.eq.s32.totalorder %s16, 0
      %p128 = por %p126, %p127
      %p129 = scmp.ne.s32.totalorder %s118, %s121
      %p130 = scmp.eq.s32.totalorder %s21, 3
      %p131 = por %p129, %p130
      %p132 = scmp.ne.s32.totalorder %s121, %s122
      %p133 = scmp.eq.s32.totalorder %s21, 0
      %p134 = por %p132, %p133
      %p135 = scmp.ne.s32.totalorder %s121, %s122
      %p136 = scmp.eq.s32.totalorder %s22, 3
      %p137 = por %p135, %p136
      %p139 = scmp.ne.s32.totalorder %s122, %s138
      %p140 = scmp.eq.s32.totalorder %s22, 0
      %p141 = por %p139, %p140
      %p142 = scmp.le.s32.totalorder 1, %s16
      %p143 = scmp.lt.s32.totalorder %s16, 5
      %p144 = pnand %p142, %p143
      %p145 = pneg %p144
      // Predicated region
      $region9: #{tpu_custom_call.1} parent=5 // pred_check
        _
      $region10: #{tpu_custom_call.1} parent=5 // pred_check_branch
        %147 = sbr.rel (%p144) target = $region12
      $region11: #{tpu_custom_call.1} parent=5 // pred_region
        %s148 = ssub.s32 %s16, 1
        // Predicated region
        $region13: #{tpu_custom_call.1} parent=11 // pred_check
          %p149 = pneg %p80
        $region14: #{tpu_custom_call.1} parent=11 // pred_check_branch
          %151 = sbr.rel (%p149) target = $region16
        $region15: #{tpu_custom_call.1} parent=11 // pred_region
          %s153 = ssub.s32 4096, 4096
          %154 = vsyncadd [#allocation6], %s153
          %s155 = smul.addr %s26, 128
          %s156 = scalar_lea.hbm %s1, %s155
          %s157 = sshll.u32 [#allocation5], 4
          %s158 = int_to_ptr.vmem [resolvable:$true] %s157
          %163 = dma.hbm_to_vmem [thread:$0]  %s156, 4096, %s158, [#allocation6], 128, 128, 8
        $region16: #{tpu_custom_call.1} parent=11 // pred_fallthru
          _
        // Predicated region
        $region17: #{tpu_custom_call.1} parent=11 // pred_check
          %p164 = pneg %p106
        $region18: #{tpu_custom_call.1} parent=11 // pred_check_branch
          %166 = sbr.rel (%p164) target = $region20
        $region19: #{tpu_custom_call.1} parent=11 // pred_region
          %p167 = scmp.lt.s32.totalorder %s26, 0
          %s168 = scalar_select %p167, %s26, 0
          %s169 = scalar_lea.vmem %s2, %s168
        $region20: #{tpu_custom_call.1} parent=11 // pred_fallthru
          _
      $region12: #{tpu_custom_call.1} parent=5 // pred_fallthru
        _
      %p170 = scmp.lt.s32.totalorder %s16, 4
      // Predicated region
      $region21: #{tpu_custom_call.1} parent=5 // pred_check
        %p171 = pneg %p170
      $region22: #{tpu_custom_call.1} parent=5 // pred_check_branch
        %173 = sbr.rel (%p171) target = $region24
      $region23: #{tpu_custom_call.1} parent=5 // pred_region
        // Predicated region
        $region25: #{tpu_custom_call.1} parent=23 // pred_check
          %p174 = pneg %p48
        $region26: #{tpu_custom_call.1} parent=23 // pred_check_branch
          %176 = sbr.rel (%p174) target = $region28
        $region27: #{tpu_custom_call.1} parent=23 // pred_region
          %s177 = sand.u32 %s38, 1
          %s178 = scalar_lea.sflag [#allocation3], %s177
          %s179 = sand.u32 %s38, 1
          %s180 = smul.addr %s179, 32
          %s181 = scalar_lea.vmem [#allocation2], %s180
          %s182 = smul.u32 2, %s23
          %s184 = ssub.s32 512, 512
          %185 = vsyncadd %s178, %s184
          %s186 = smul.addr %s182, 2
          %s187 = smul.addr %s186, 128
          %s188 = scalar_lea.hbm %s0, %s187
          %s189 = sshll.u32 %s181, 4
          %s190 = int_to_ptr.vmem [resolvable:$true] %s189
          %195 = dma.hbm_to_vmem [thread:$0]  %s188, 512, %s190, %s178, 256, 256, 16
        $region28: #{tpu_custom_call.1} parent=23 // pred_fallthru
          _
      $region24: #{tpu_custom_call.1} parent=5 // pred_fallthru
        _
      %p196 = scmp.le.s32.totalorder 1, %s16
      %p197 = scmp.lt.s32.totalorder %s16, 5
      %p198 = pnand %p196, %p197
      %p199 = pneg %p198
      // Predicated region
      $region29: #{tpu_custom_call.1} parent=5 // pred_check
        _
      $region30: #{tpu_custom_call.1} parent=5 // pred_check_branch
        %201 = sbr.rel (%p198) target = $region32
      $region31: #{tpu_custom_call.1} parent=5 // pred_region
        %s202 = ssub.s32 %s16, 1
        %s203 = sand.u32 %s41, 1
        %s204 = scalar_lea.sflag [#allocation3], %s203
        %s205 = sand.u32 %s41, 1
        %s206 = smul.addr %s205, 32
        %s207 = scalar_lea.vmem [#allocation2], %s206
        // Predicated region
        $region33: #{tpu_custom_call.1} parent=31 // pred_check
          %p208 = pneg %p54
        $region34: #{tpu_custom_call.1} parent=31 // pred_check_branch
          %210 = sbr.rel (%p208) target = $region36
        $region35: #{tpu_custom_call.1} parent=31 // pred_region
          %211 = dma.done %s204, 512
        $region36: #{tpu_custom_call.1} parent=31 // pred_fallthru
          _
        // Predicated region
        $region37: #{tpu_custom_call.1} parent=31 // pred_check
          %p212 = pneg %p80
        $region38: #{tpu_custom_call.1} parent=31 // pred_check_branch
          %214 = sbr.rel (%p212) target = $region40
        $region39: #{tpu_custom_call.1} parent=31 // pred_region
          %215 = dma.done [#allocation6], 4096
        $region40: #{tpu_custom_call.1} parent=31 // pred_fallthru
          _
        %s216 = sand.u32 %s41, 1
        %s217 = scalar_lea.sflag [#allocation3], %s216
        %s218 = sand.u32 %s41, 1
        %s219 = smul.addr %s218, 32
        %s220 = scalar_lea.vmem [#allocation2], %s219
        %p221 = pneg %p54
        %p222 = pneg %p51
        %p223 = pneg %p80
        %p224 = pneg %p77
        %p225 = scmp.lt.s32.totalorder %s26, 0
        %s226 = scalar_select %p225, %s26, 0
        %s227 = scalar_lea.vmem %s2, %s226
        %p228 = pneg %p106
        %p229 = pneg %p103
        %p230 = pneg %p134
        %p231 = pneg %p131
        %s232 = sand.u32 %s121, 1
        %s233 = scalar_lea.sflag [#allocation4], %s232
        %s234 = sand.u32 %s121, 1
        %s235 = smul.addr %s234, 16
        %s236 = scalar_lea.vmem [#allocation7], %s235
        %s237 = smul.u32 2, %s25
        %p238 = scmp.lt.s32.totalorder %s26, 0
        %s239 = scalar_select %p238, %s26, 0
        %s240 = scalar_lea.vmem %s2, %s239
        %s241 = smul.u32 2, %s25
        %v242 = vld [vmem:[%s207] sm:$0xff]
        %v243 = vld [vmem:[%s207 + $0x8] sm:$0xff]
        %v244 = vld [vmem:[%s207 + $0x10] sm:$0xff]
        %v245 = vld [vmem:[%s207 + $0x18] sm:$0xff]
        %v246 = vld [vmem:[#allocation5] sm:$0xff]
        %v247 = vld [vmem:[#allocation5 + $0x8] sm:$0xff]
        %v248 = vld [vmem:[#allocation5 + $0x10] sm:$0xff]
        %v249 = vld [vmem:[#allocation5 + $0x18] sm:$0xff]
        %v250 = vld [vmem:[#allocation5 + $0x20] sm:$0xff]
        %v251 = vld [vmem:[#allocation5 + $0x28] sm:$0xff]
        %v252 = vld [vmem:[#allocation5 + $0x30] sm:$0xff]
        %v253 = vld [vmem:[#allocation5 + $0x38] sm:$0xff]
        %v254 = vld [vmem:[#allocation5 + $0x40] sm:$0xff]
        %v255 = vld [vmem:[#allocation5 + $0x48] sm:$0xff]
        %v256 = vld [vmem:[#allocation5 + $0x50] sm:$0xff]
        %v257 = vld [vmem:[#allocation5 + $0x58] sm:$0xff]
        %v258 = vld [vmem:[#allocation5 + $0x60] sm:$0xff]
        %v259 = vld [vmem:[#allocation5 + $0x68] sm:$0xff]
        %v260 = vld [vmem:[#allocation5 + $0x70] sm:$0xff]
        %v261 = vld [vmem:[#allocation5 + $0x78] sm:$0xff]
        %v262 = vld [vmem:[#allocation5 + $0x80] sm:$0xff]
        %v263 = vld [vmem:[#allocation5 + $0x88] sm:$0xff]
        %v264 = vld [vmem:[#allocation5 + $0x90] sm:$0xff]
        %v265 = vld [vmem:[#allocation5 + $0x98] sm:$0xff]
        %v266 = vld [vmem:[#allocation5 + $0xa0] sm:$0xff]
        %v267 = vld [vmem:[#allocation5 + $0xa8] sm:$0xff]
        %v268 = vld [vmem:[#allocation5 + $0xb0] sm:$0xff]
        %v269 = vld [vmem:[#allocation5 + $0xb8] sm:$0xff]
        %v270 = vld [vmem:[#allocation5 + $0xc0] sm:$0xff]
        %v271 = vld [vmem:[#allocation5 + $0xc8] sm:$0xff]
        %v272 = vld [vmem:[#allocation5 + $0xd0] sm:$0xff]
        %v273 = vld [vmem:[#allocation5 + $0xd8] sm:$0xff]
        %v274 = vld [vmem:[#allocation5 + $0xe0] sm:$0xff]
        %v275 = vld [vmem:[#allocation5 + $0xe8] sm:$0xff]
        %v276 = vld [vmem:[#allocation5 + $0xf0] sm:$0xff]
        %v277 = vld [vmem:[#allocation5 + $0xf8] sm:$0xff]
        %v278 = vld [vmem:[%s240] sm:$0x1]
        %v280 = vlaneseq
        %v281 = vshrl.u32 %v280, 7
        %v282 = vsub.s32 0, %v281
        %v283 = vrot.slane %v278, %v282
        %285 = vmatprep.subr.mxu0 0.0
        %286 = vmatpush1.msra.mxu0 %v261
        %287 = vmatprep.subr.mxu0 0.0
        %288 = vmatpush1.msra.mxu0 %v260
        %289 = vmatprep.subr.mxu0 0.0
        %290 = vmatpush1.msra.mxu0 %v259
        %291 = vmatprep.subr.mxu0 0.0
        %292 = vmatpush1.msra.mxu0 %v258
        %293 = vmatprep.subr.mxu0 0.0
        %294 = vmatpush1.msra.mxu0 %v257
        %295 = vmatprep.subr.mxu0 0.0
        %296 = vmatpush1.msra.mxu0 %v256
        %297 = vmatprep.subr.mxu0 0.0
        %298 = vmatpush1.msra.mxu0 %v255
        %299 = vmatprep.subr.mxu0 0.0
        %300 = vmatpush1.msra.mxu0 %v254
        %301 = vmatprep.subr.mxu0 0.0
        %302 = vmatpush1.msra.mxu0 %v253
        %303 = vmatprep.subr.mxu0 0.0
        %304 = vmatpush1.msra.mxu0 %v252
        %305 = vmatprep.subr.mxu0 0.0
        %306 = vmatpush1.msra.mxu0 %v251
        %307 = vmatprep.subr.mxu0 0.0
        %308 = vmatpush1.msra.mxu0 %v250
        %309 = vmatprep.subr.mxu0 0.0
        %310 = vmatpush1.msra.mxu0 %v249
        %311 = vmatprep.subr.mxu0 0.0
        %312 = vmatpush1.msra.mxu0 %v248
        %313 = vmatprep.subr.mxu0 0.0
        %314 = vmatpush1.msra.mxu0 %v247
        %315 = vmatprep.subr.mxu0 0.0
        %316 = vmatpush1.msra.mxu0 %v246
        %317 = vmatprep.subr.mxu0 0.0
        %318 = vmatpush2.msra.mxu0 %v277
        %319 = vmatprep.subr.mxu0 0.0
        %320 = vmatpush2.msra.mxu0 %v276
        %321 = vmatprep.subr.mxu0 0.0
        %322 = vmatpush2.msra.mxu0 %v275
        %323 = vmatprep.subr.mxu0 0.0
        %324 = vmatpush2.msra.mxu0 %v274
        %325 = vmatprep.subr.mxu0 0.0
        %326 = vmatpush2.msra.mxu0 %v273
        %327 = vmatprep.subr.mxu0 0.0
        %328 = vmatpush2.msra.mxu0 %v272
        %329 = vmatprep.subr.mxu0 0.0
        %330 = vmatpush2.msra.mxu0 %v271
        %331 = vmatprep.subr.mxu0 0.0
        %332 = vmatpush2.msra.mxu0 %v270
        %333 = vmatprep.subr.mxu0 0.0
        %334 = vmatpush2.msra.mxu0 %v269
        %335 = vmatprep.subr.mxu0 0.0
        %336 = vmatpush2.msra.mxu0 %v268
        %337 = vmatprep.subr.mxu0 0.0
        %338 = vmatpush2.msra.mxu0 %v267
        %339 = vmatprep.subr.mxu0 0.0
        %340 = vmatpush2.msra.mxu0 %v266
        %341 = vmatprep.subr.mxu0 0.0
        %342 = vmatpush2.msra.mxu0 %v265
        %343 = vmatprep.subr.mxu0 0.0
        %344 = vmatpush2.msra.mxu0 %v264
        %345 = vmatprep.subr.mxu0 0.0
        %346 = vmatpush2.msra.mxu0 %v263
        %347 = vmatprep.subr.mxu0 0.0
        %348 = vmatpush2.msra.mxu0 %v262
        %349 = vmatprep.mubr.f32.mxu0 %v243
        %350 = vmatmul.mubr.f32.gmra.mxu0 %v242
        %v351 = vpop.f32.mrf.mxu0
        %v352 = vadd.f32 %v283, %v351
        %v353 = vpop.f32.mrf.mxu0
        %354 = vmatprep.mubr.f32.mxu0 %v245
        %355 = vmatmul.mubr.f32.gmra.mxu0 %v244
        %v356 = vpop.f32.mrf.mxu0
        %v357 = vadd.f32 %v283, %v356
        %v358 = vpop.f32.mrf.mxu0
        %359 = vdwg.mxu0
        %v360 = vsub.f32 0.0, %v352
        %v361 = vsub.f32 0.0, %v357
        %v362 = vmul.f32 %v360, 1.442695
        %v363 = vpow.pop %v362
        %v364 = vmul.f32 %v361, 1.442695
        %v365 = vpow.pop %v364
        %v366 = vadd.f32 %v363, 1.0
        %v367 = vadd.f32 %v365, 1.0
        %v368 = vrcp.pop %v366
        %v369 = vmul.f32 1.0, %v368
        %v370 = vrcp.pop %v367
        %v371 = vmul.f32 1.0, %v370
        %v372 = vmul.f32 %v352, %v369
        %v373 = vmul.f32 %v357, %v371
        %v374 = vmul.f32 %v372, 2.0
        %v375 = vmul.f32 %v373, 2.0
        %376 = vst [vmem:[%s236] sm:$0xff] %v374
        %377 = vst [vmem:[%s236 + $0x8] sm:$0xff] %v375
        %s378 = sand.u32 %s121, 1
        %s379 = scalar_lea.sflag [#allocation4], %s378
        %s380 = sand.u32 %s121, 1
        %s381 = smul.addr %s380, 16
        %s382 = scalar_lea.vmem [#allocation7], %s381
        // Predicated region
        $region41: #{tpu_custom_call.1} parent=31 // pred_check
          %p383 = pneg %p131
        $region42: #{tpu_custom_call.1} parent=31 // pred_check_branch
          %385 = sbr.rel (%p383) target = $region44
        $region43: #{tpu_custom_call.1} parent=31 // pred_region
          %s386 = smul.u32 2, %s25
          %s388 = ssub.s32 256, 256
          %389 = vsyncadd %s379, %s388
          %s390 = sadd.s32 %s26, %s386
          %s391 = smul.addr %s390, 128
          %s392 = scalar_lea.hbm %s3, %s391
          %s393 = sshll.u32 %s382, 4
          %s394 = int_to_ptr.vmem [resolvable:$true] %s393
          %399 = dma.vmem_to_hbm [thread:$0]  %s394, 256, %s392, %s379, 128, 128, 8
        $region44: #{tpu_custom_call.1} parent=31 // pred_fallthru
          _
      $region32: #{tpu_custom_call.1} parent=5 // pred_fallthru
        _
      %p400 = scmp.le.s32.totalorder 2, %s16
      // Predicated region
      $region45: #{tpu_custom_call.1} parent=5 // pred_check
        %p401 = pneg %p400
      $region46: #{tpu_custom_call.1} parent=5 // pred_check_branch
        %403 = sbr.rel (%p401) target = $region48
      $region47: #{tpu_custom_call.1} parent=5 // pred_region
        %s404 = ssub.s32 %s16, 2
        // Predicated region
        $region49: #{tpu_custom_call.1} parent=47 // pred_check
          %p405 = pneg %p137
        $region50: #{tpu_custom_call.1} parent=47 // pred_check_branch
          %407 = sbr.rel (%p405) target = $region52
        $region51: #{tpu_custom_call.1} parent=47 // pred_region
          %s408 = sand.u32 %s122, 1
          %s409 = scalar_lea.sflag [#allocation4], %s408
          %s410 = sand.u32 %s122, 1
          %s411 = smul.addr %s410, 16
          %s412 = scalar_lea.vmem [#allocation7], %s411
          %413 = dma.done %s409, 256
        $region52: #{tpu_custom_call.1} parent=47 // pred_fallthru
          _
      $region48: #{tpu_custom_call.1} parent=5 // pred_fallthru
        _
    $region6: #{tpu_custom_call.1} parent=1 // loop_footer
      %s20 = sadd.s32 1, %s16
    $region7: #{tpu_custom_call.1} parent=1 // loop_footer_branch
      %15 = sbr.rel target = $region3
    $region8: #{tpu_custom_call.1} parent=1 // loop_exit
      _
    %414 = vsyncpa [#allocation3], 1
    %s415 = scalar_lea.sflag [#allocation3], 1
    %416 = vsyncpa %s415, 1
    %417 = vsyncpa [#allocation6], 1
    %418 = vsyncpa [#allocation4], 1
    %s419 = scalar_lea.sflag [#allocation4], 1
    %420 = vsyncpa %s419, 1

</llo_original>
